<compile_context>
chip_gen: v7x
topology: tpu7x:2x2x1
jax: 0.10.0
libtpu: 0.0.40
codegen_flags: <defaults>
</compile_context>

<pallas_src>
import functools

import numpy as np
import jax
import jax.numpy as jnp
from jax import lax
from jax.experimental import pallas as pl
from jax.experimental.pallas import tpu as pltpu

OH1, OW1 = 7, 6  # first adaptive pool output size


def _ceil_div(a, b):
    return -(-a // b)


def _round_up(a, b):
    return _ceil_div(a, b) * b


def _round_down(a, b):
    return (a // b) * b


def _build_weight_map(H, W):
    """Per-pixel weights folding both adaptive pools into one reduction."""
    w = np.zeros((H, W), dtype=np.float32)
    for i in range(OH1):
        h0 = (i * H) // OH1
        h1 = _ceil_div((i + 1) * H, OH1)
        for j in range(OW1):
            w0 = (j * W) // OW1
            w1 = _ceil_div((j + 1) * W, OW1)
            area = (h1 - h0) * (w1 - w0)
            w[h0:h1, w0:w1] += 1.0 / (area * OH1 * OW1)
    return w.reshape(1, H * W)


def _pool_kernel(x_ref, w_ref, o_ref, acc_ref, *, n_hw, valid_cols):
    """x_ref: (tr, thw) input chunk; w_ref: (1, thw) weights; acc f32 (tr, 1)."""
    k = pl.program_id(1)

    @pl.when(k == 0)
    def _init():
        acc_ref[...] = jnp.zeros_like(acc_ref)

    x = x_ref[...].astype(jnp.float32)        # single upcast; f32 accumulation
    prod = x * w_ref[...]                     # (1, thw) broadcasts over sublanes

    if valid_cols is not None:
        # Partial last HW chunk: zero the out-of-bounds columns (unspecified
        # data would otherwise corrupt the sum).
        thw = prod.shape[-1]
        col = lax.broadcasted_iota(jnp.int32, prod.shape, dimension=1)
        prod = jnp.where(k * thw + col < valid_cols, prod, 0.0)

    acc_ref[...] += jnp.sum(prod, axis=-1, keepdims=True)

    @pl.when(k == n_hw - 1)
    def _finalize():
        o_ref[...] = acc_ref[...].astype(o_ref.dtype)


def _choose_tiling(rows, HW, itemsize, footprint_bytes):
    """Pick (row_tile, hw_tile) so the double-buffered pipeline fits VMEM."""
    # Estimated VMEM bytes per x-tile element: 2x double-buffered input plus
    # the f32 upcast / product intermediates Mosaic may materialize.
    per_elem = 2 * itemsize + 8

    # Prefer tiles spanning the full HW row (single reduction step per row).
    tr_full = footprint_bytes // (HW * per_elem)
    if tr_full >= min(8, rows):
        tr_cand = int(tr_full)
        if rows >= 16:
            # Keep >= 2 steps on the "parallel" axis for v7x megacore sharding.
            tr_cand = min(tr_cand, _round_up(_ceil_div(rows, 2), 8))
        if tr_cand >= rows:
            tr = rows                       # block == full dim (always legal)
        else:
            tr = max(8, _round_down(tr_cand, 8))
        return tr, HW

    # HW too wide for even an 8-row full-width tile: chunk the reduction axis.
    tr = rows if rows < 8 else 8
    thw = _round_down(footprint_bytes // (max(tr, 8) * per_elem), 128)
    thw = max(128, min(thw, _round_up(HW, 128)))
    return tr, thw


def adaptive_avg_pool_model(x):
    """Equivalent of Model.forward. x: (N, C, H, W) -> (N, C, 1, 1) in x.dtype."""
    N, C, H, W = x.shape
    rows, HW = N * C, H * W
    itemsize = jnp.dtype(x.dtype).itemsize

    try:
        vmem_phys = int(pltpu.get_tpu_info().vmem_capacity_bytes)
    except Exception:
        vmem_phys = 64 << 20  # conservative fallback (v7x per-TC VMEM)

    # Total pipeline footprint target: ~70% of physical VMEM, capped at 96 MiB
    # (~45 MiB on v7x, ~90 MiB on v5e/v6e).
    footprint = min(int(vmem_phys * 0.7), 96 << 20)

    tr, thw = _choose_tiling(rows, HW, itemsize, footprint)
    n_hw = _ceil_div(HW, thw)
    needs_mask = (HW % thw) != 0

    weight = jnp.asarray(_build_weight_map(H, W))   # (1, HW) f32, trace-time const
    x2 = x.reshape(rows, HW)                        # lane-dense; no data movement

    kernel = functools.partial(
        _pool_kernel, n_hw=n_hw, valid_cols=HW if needs_mask else None
    )

    vmem_limit = int(min(vmem_phys * 0.75, max(footprint + (4 << 20), 32 << 20)))

    out = pl.pallas_call(
        kernel,
        out_shape=jax.ShapeDtypeStruct((rows, 1), x.dtype),
        grid_spec=pltpu.PrefetchScalarGridSpec(
            num_scalar_prefetch=0,
            grid=(pl.cdiv(rows, tr), n_hw),
            in_specs=[
                pl.BlockSpec((tr, thw), lambda r, k: (r, k)),
                pl.BlockSpec((1, thw), lambda r, k: (0, k)),
            ],
            out_specs=pl.BlockSpec((tr, 1), lambda r, k: (r, 0)),
            scratch_shapes=[pltpu.VMEM((tr, 1), jnp.float32)],
        ),
        compiler_params=pltpu.CompilerParams(
            dimension_semantics=("parallel", "arbitrary"),
            vmem_limit_bytes=vmem_limit,
        ),
    )(x2, weight)

    return out.reshape(N, C, 1, 1)


def _reference(x):
    # Pure-JAX reference matching PyTorch adaptive_avg_pool2d semantics.
    N, C, H, W = x.shape
    xf = x.astype(jnp.float32)
    rows = []
    for i in range(OH1):
        h0 = (i * H) // OH1
        h1 = _ceil_div((i + 1) * H, OH1)
        cols = []
        for j in range(OW1):
            w0 = (j * W) // OW1
            w1 = _ceil_div((j + 1) * W, OW1)
            cols.append(jnp.mean(xf[:, :, h0:h1, w0:w1], axis=(2, 3)))
        rows.append(jnp.stack(cols, axis=-1))
    pooled = jnp.stack(rows, axis=-2)  # (N, C, 7, 6)
    return jnp.mean(pooled, axis=(2, 3), keepdims=True).astype(x.dtype)


if __name__ == "__main__":
    key = jax.random.PRNGKey(0)
    x = jax.random.normal(key, (2, 4, 16, 16), dtype=jnp.float32)

    out = adaptive_avg_pool_model(x)
    out = jax.block_until_ready(out)

    ref = _reference(x)
    assert out.shape == (2, 4, 1, 1), out.shape
    assert jnp.allclose(out, ref, atol=1e-5, rtol=1e-5), (
        f"mismatch: max abs err {jnp.max(jnp.abs(out - ref))}"
    )
    print("KERNEL_OK")
</pallas_src>

<mosaic_0001>
module attributes {stable_mosaic.version = 11 : i64} {
  func.func @_pool_kernel(%arg0: i32, %arg1: i32, %arg2: memref<8x256xf32, #tpu.memory_space<vmem>>, %arg3: memref<1x256xf32, #tpu.memory_space<vmem>>, %arg4: memref<8x1xf32, #tpu.memory_space<vmem>>, %arg5: memref<8x1xf32, #tpu.memory_space<vmem>>) attributes {dimension_semantics = [#tpu.dimension_semantics<parallel>, #tpu.dimension_semantics<arbitrary>], iteration_bounds = array<i64: 1, 1>, scalar_prefetch = 0 : i64, scratch_operands = 1 : i64, tpu.core_type = #tpu.core_type<tc>, window_params = [{transform_indices = @transform_0, window_bounds = array<i64: 8, 256>}, {transform_indices = @transform_1, window_bounds = array<i64: 1, 256>}, {transform_indices = @transform_2, window_bounds = array<i64: 8, 1>}]} {
    %c0_i32 = arith.constant 0 : i32
    %0 = arith.cmpi eq, %arg1, %c0_i32 : i32
    %1 = arith.extui %0 : i1 to i32
    %c0_i32_0 = arith.constant 0 : i32
    %2 = arith.cmpi ne, %1, %c0_i32_0 : i32
    scf.if %2 {
      %cst_10 = arith.constant 0.000000e+00 : f32
      %15 = vector.broadcast %cst_10 : f32 to vector<8x1xf32>
      %c0_11 = arith.constant 0 : index
      %c0_12 = arith.constant 0 : index
      %16 = vector.load %arg5[%c0_11, %c0_12] : memref<8x1xf32, #tpu.memory_space<vmem>>, vector<8x1xf32>
      tpu.vector_store %arg5[%c0_11, %c0_12], %15 {strides = array<i32>} : memref<8x1xf32, #tpu.memory_space<vmem>>, vector<8x1xf32>,
    } else {
    }
    %c0 = arith.constant 0 : index
    %c0_1 = arith.constant 0 : index
    %3 = vector.load %arg2[%c0, %c0_1] : memref<8x256xf32, #tpu.memory_space<vmem>>, vector<8x256xf32>
    %c0_2 = arith.constant 0 : index
    %c0_3 = arith.constant 0 : index
    %4 = vector.load %arg3[%c0_2, %c0_3] : memref<1x256xf32, #tpu.memory_space<vmem>>, vector<1x256xf32>
    %5 = vector.broadcast %4 : vector<1x256xf32> to vector<8x256xf32>
    %6 = arith.mulf %3, %5 : vector<8x256xf32>
    %c0_4 = arith.constant 0 : index
    %c0_5 = arith.constant 0 : index
    %7 = vector.load %arg5[%c0_4, %c0_5] : memref<8x1xf32, #tpu.memory_space<vmem>>, vector<8x1xf32>
    %cst = arith.constant dense<0.000000e+00> : vector<8xf32>
    %8 = vector.multi_reduction <add>, %6, %cst [1] : vector<8x256xf32> to vector<8xf32>
    %9 = vector.shape_cast %8 : vector<8xf32> to vector<8x1xf32>
    %10 = arith.addf %7, %9 : vector<8x1xf32>
    %c0_6 = arith.constant 0 : index
    %c0_7 = arith.constant 0 : index
    %11 = vector.load %arg5[%c0_6, %c0_7] : memref<8x1xf32, #tpu.memory_space<vmem>>, vector<8x1xf32>
    tpu.vector_store %arg5[%c0_6, %c0_7], %10 {strides = array<i32>} : memref<8x1xf32, #tpu.memory_space<vmem>>, vector<8x1xf32>,
    %c0_i32_8 = arith.constant 0 : i32
    %12 = arith.cmpi eq, %arg1, %c0_i32_8 : i32
    %13 = arith.extui %12 : i1 to i32
    %c0_i32_9 = arith.constant 0 : i32
    %14 = arith.cmpi ne, %13, %c0_i32_9 : i32
    scf.if %14 {
      %c0_10 = arith.constant 0 : index
      %c0_11 = arith.constant 0 : index
      %15 = vector.load %arg5[%c0_10, %c0_11] : memref<8x1xf32, #tpu.memory_space<vmem>>, vector<8x1xf32>
      %c0_12 = arith.constant 0 : index
      %c0_13 = arith.constant 0 : index
      %16 = vector.load %arg4[%c0_12, %c0_13] : memref<8x1xf32, #tpu.memory_space<vmem>>, vector<8x1xf32>
      tpu.vector_store %arg4[%c0_12, %c0_13], %15 {strides = array<i32>} : memref<8x1xf32, #tpu.memory_space<vmem>>, vector<8x1xf32>,
    } else {
    }
    return
  }
  func.func @transform_0(%arg0: i32, %arg1: i32) -> (i32, i32) {
    %c0_i32 = arith.constant 0 : i32
    return %arg0, %arg1 : i32, i32
  }
  func.func @transform_1(%arg0: i32, %arg1: i32) -> (i32, i32) {
    %c0_i32 = arith.constant 0 : i32
    %c0_i32_0 = arith.constant 0 : i32
    return %c0_i32, %arg1 : i32, i32
  }
  func.func @transform_2(%arg0: i32, %arg1: i32) -> (i32, i32) {
    %c0_i32 = arith.constant 0 : i32
    %c0_i32_0 = arith.constant 0 : i32
    return %arg0, %c0_i32 : i32, i32
  }
}

</mosaic_0001>

<llo_original>
// kernel: tpu_custom_call.1
$region0: #{tpu_custom_call.1}
  #allocation0 [shape = 'u32[]', space=smem, size = 0x4, offset = 0x4, fixed_abs, tag = 'smem constant byte address 0x4 - core index']
  #allocation1 [shape = 'u32[144,128]{1,0:T(1,128)}', space=vmem, size = 0x12000, scoped, tag = 'internal scratch']
  #allocation2 [shape = 'f32[8,1]{1,0:T(8,128)}', space=vmem, size = 0x1000, scoped, tag = 'scratch operand']
  %s0 = inlined_call_operand.hbm [shape: f32[8,256], index: 0, kind: input, shape index: {}]
  %s1 = inlined_call_operand.vmem [shape: f32[1,256], index: 1, kind: input, shape index: {}]
  %s2 = inlined_call_operand.vmem [shape: f32[8,1], index: 2, kind: output, shape index: {}]
  %s3 = sld [smem:[#allocation0]]
  $region30: #{tpu_custom_call.1} parent=0
    _
  %s5 = ssub.s32 1, %s3
  %s6 = scalar_select 0, %s5, %s3
  $region1: #{tpu_custom_call.1} parent=0
    #allocation3 [shape = 'u8[8192]{0}', space=vmem, size = 0x2000, scoped, tag = 'input window, operand 0, single buffered']
    #allocation4 [shape = 's32[1]{0}', space=sflag, size = 0x4, scoped, tag = 'scoped memory for tpu_custom_call.1']
    %7 = vsyncpa [#allocation4], 0
    // Predicated region
    $region2: #{tpu_custom_call.1} parent=1 // pred_check
      _
    $region3: #{tpu_custom_call.1} parent=1 // pred_check_branch
      %9 = sbr.rel (0) target = $region5
    $region4: #{tpu_custom_call.1} parent=1 // pred_region
      %s11 = ssub.s32 256, 256
      %12 = vsyncadd [#allocation4], %s11
      %s14 = sshll.u32 [#allocation3], 4
      %s15 = int_to_ptr.vmem [resolvable:$true] %s14
      %17 = dma.hbm_to_vmem [thread:$0]  %s0, 256, %s15, [#allocation4]
    $region5: #{tpu_custom_call.1} parent=1 // pred_fallthru
      _
    // Predicated region
    $region6: #{tpu_custom_call.1} parent=1 // pred_check
      _
    $region7: #{tpu_custom_call.1} parent=1 // pred_check_branch
      %19 = sbr.rel (0) target = $region9
    $region8: #{tpu_custom_call.1} parent=1 // pred_region
      _
    $region9: #{tpu_custom_call.1} parent=1 // pred_fallthru
      _
    // Predicated region
    $region10: #{tpu_custom_call.1} parent=1 // pred_check
      _
    $region11: #{tpu_custom_call.1} parent=1 // pred_check_branch
      %21 = sbr.rel (0) target = $region13
    $region12: #{tpu_custom_call.1} parent=1 // pred_region
      %22 = dma.done [#allocation4], 256
    $region13: #{tpu_custom_call.1} parent=1 // pred_fallthru
      _
    %p23 = scmp.eq.s32.totalorder 0, 0
    // Predicated region
    $region14: #{tpu_custom_call.1} parent=1 // pred_check
      %p24 = pneg %p23
    $region15: #{tpu_custom_call.1} parent=1 // pred_check_branch
      %26 = sbr.rel (%p24) target = $region17
    $region16: #{tpu_custom_call.1} parent=1 // pred_region
      %vm27 = vcmask 7168
      %28 = vst.msk [vmem:[#allocation2] sm:$0xff] %vm27, 0.0
    $region17: #{tpu_custom_call.1} parent=1 // pred_fallthru
      _
    %v29 = vld [vmem:[#allocation3] sm:$0xff]
    %v30 = vld [vmem:[#allocation3 + $0x8] sm:$0xff]
    %v31 = vld [vmem:[%s1] sm:$0x3]
    %v33 = vlaneseq
    %v34 = vshrl.u32 %v33, 7
    %v35 = vsub.s32 0, %v34
    %v36 = vrot.slane %v31, %v35
    %v37 = vlaneseq
    %v38 = vshrl.u32 %v37, 7
    %v39 = vsub.s32 1, %v38
    %v40 = vrot.slane %v31, %v39
    %v43 = vmul.f32 %v29, %v36
    %v44 = vmul.f32 %v30, %v40
    %v45 = vld [vmem:[#allocation2] sm:$0xff]
    %v46 = vadd.f32 %v43, %v44
    %47 = vadd.xlane.f32.xlu0 %v46
    %v48 = vpop.xlane.xlu0 %47
    %v49 = vadd.f32 %v45, %v48
    %vm50 = vcmask 7168
    %51 = vst.msk [vmem:[#allocation2] sm:$0xff] %vm50, %v49
    // Predicated region
    $region18: #{tpu_custom_call.1} parent=1 // pred_check
      %p52 = pneg %p23
    $region19: #{tpu_custom_call.1} parent=1 // pred_check_branch
      %54 = sbr.rel (%p52) target = $region21
    $region20: #{tpu_custom_call.1} parent=1 // pred_region
      %v55 = vld [vmem:[#allocation2] sm:$0xff]
      %56 = vst.msk [vmem:[%s2] sm:$0xff] %vm50, %v55
    $region21: #{tpu_custom_call.1} parent=1 // pred_fallthru
      _
    // Predicated region
    $region22: #{tpu_custom_call.1} parent=1 // pred_check
      _
    $region23: #{tpu_custom_call.1} parent=1 // pred_check_branch
      %58 = sbr.rel (0) target = $region25
    $region24: #{tpu_custom_call.1} parent=1 // pred_region
      _
    $region25: #{tpu_custom_call.1} parent=1 // pred_fallthru
      _
    // Predicated region
    $region26: #{tpu_custom_call.1} parent=1 // pred_check
      _
    $region27: #{tpu_custom_call.1} parent=1 // pred_check_branch
      %60 = sbr.rel (0) target = $region29
    $region28: #{tpu_custom_call.1} parent=1 // pred_region
      _
    $region29: #{tpu_custom_call.1} parent=1 // pred_fallthru
      _
    %61 = vsyncpa [#allocation4], 1

</llo_original>
